<compile_context>
chip_gen: v5e
topology: v5e:2x2
jax: 0.10.0
libtpu: 0.0.40
codegen_flags: <defaults>
</compile_context>

<pallas_src>
import math

import jax
import jax.numpy as jnp
from jax.experimental import pallas as pl
from jax.experimental.pallas import tpu as pltpu

_LANE = 128
_MIB = 1024 * 1024


def _cat_kernel(*refs):
    """refs = (*in_refs, out_ref): copy each input tile into its lane slice."""
    out_ref = refs[-1]
    in_refs = refs[:-1]
    off = 0
    for r in in_refs:
        w = r.shape[-1]
        # Static, 128-aligned lane slice -> unmasked full-vreg vector stores.
        out_ref[:, off:off + w] = r[...]
        off += w


def _round_up(x, m):
    return ((x + m - 1) // m) * m


def _vmem_working_budget():
    """Bytes allowed for the double-buffered tile working set, per generation."""
    try:
        cap = pltpu.get_tpu_info().vmem_capacity_bytes
    except Exception:
        cap = 64 * _MIB  # conservative default (v7x per-TC physical VMEM)
    # ~3/8 of physical: ~24 MiB on v7x (64 MiB), ~48 MiB on v5e/v6e (128 MiB).
    return max(12 * _MIB, (cap * 3) // 8)


def _row_tile(rows, widths, itemsize, budget):
    """Row-tile size for the pipelined copy.

    Footprint uses *lane-padded* widths: each input block of width w occupies
    round_up(w, 128) lanes in VMEM, the output occupies round_up(sum(w), 128)
    lanes, and every buffer is double-buffered.  Tile size is bytes-driven (no
    hard row cap) so per-grid-step overhead (~0.35 us) stays negligible.
    """
    w_total = sum(widths)
    padded_lanes = (sum(_round_up(w, _LANE) for w in widths)
                    + _round_up(w_total, _LANE))
    # Sublane granularity: f32 -> 8, bf16 -> 16, int8/fp8 -> 32 rows.
    g = 8 * (4 // itemsize) if itemsize in (1, 2, 4) else 8
    # Double-buffered working set = 2 * padded_lanes * tile_r * itemsize.
    t = budget // max(1, 2 * padded_lanes * itemsize)
    t = max(8, (t // g) * g)
    if t >= rows:
        return rows  # single full-extent block on the row axis (always legal)
    return t         # ragged last block is padded/masked by Pallas automatically


def cat_last_dim(tensors):
    """Concatenate a list of arrays along the last dim (torch.cat(x, dim=-1))."""
    tensors = list(tensors)
    assert len(tensors) >= 1
    if len(tensors) == 1:
        return tensors[0]

    lead = tensors[0].shape[:-1]
    for t in tensors:
        assert t.shape[:-1] == lead, "leading dims must match for cat(dim=-1)"

    # torch.cat applies type promotion across mixed-dtype inputs.
    dtype = jnp.result_type(*[t.dtype for t in tensors])
    tensors = [t.astype(dtype) for t in tensors]

    widths = [int(t.shape[-1]) for t in tensors]
    w_total = sum(widths)
    rows = int(math.prod(lead)) if lead else 1
    itemsize = jnp.dtype(dtype).itemsize

    # Lane-alignment fast path: only run the Pallas copy when every segment
    # width is a multiple of 128 lanes (=> every output store is lane-dense).
    aligned = all(w % _LANE == 0 for w in widths)
    if not aligned or rows < 8:
        return jnp.concatenate(tensors, axis=-1)

    flats = [t.reshape(rows, w) for t, w in zip(tensors, widths)]

    budget = _vmem_working_budget()
    tile_r = _row_tile(rows, widths, itemsize, budget)
    grid = (pl.cdiv(rows, tile_r),)

    working_set = 2 * tile_r * itemsize * (
        sum(_round_up(w, _LANE) for w in widths) + _round_up(w_total, _LANE))
    vmem_limit = max(int(working_set) + 8 * _MIB, 32 * _MIB)

    out_flat = pl.pallas_call(
        _cat_kernel,
        out_shape=jax.ShapeDtypeStruct((rows, w_total), dtype),
        grid=grid,
        # Row axis tiled; last dim is always the full per-input width, so the
        # (8,128) BlockSpec constraint is satisfied for all 128-aligned widths.
        in_specs=[pl.BlockSpec((tile_r, w), lambda i: (i, 0)) for w in widths],
        out_specs=pl.BlockSpec((tile_r, w_total), lambda i: (i, 0)),
        compiler_params=pltpu.CompilerParams(
            dimension_semantics=("parallel",),   # row tiles are independent
            vmem_limit_bytes=vmem_limit),
        # Pure memory op: tell XLA's scheduler there are 0 flops.
        cost_estimate=pl.CostEstimate(
            flops=0, transcendentals=0,
            bytes_accessed=2 * rows * w_total * itemsize),
    )(*flats)

    # TODO(synk): for very large 128-aligned segments, a gridless HBM->HBM
    # strided DMA (memory_space=pl.ANY + one pltpu.make_async_copy per input)
    # would drop the VMEM round-trip and all per-step grid overhead entirely.
    return out_flat.reshape(*lead, w_total)


if __name__ == "__main__":
    key = jax.random.PRNGKey(0)
    k1, k2, k3, k4, k5 = jax.random.split(key, 5)

    # Lane-aligned widths (multiples of 128): exercises the Pallas copy kernel.
    a1 = jax.random.normal(k1, (2, 4, 16, 128), dtype=jnp.float32)
    a2 = jax.random.normal(k2, (2, 4, 16, 256), dtype=jnp.float32)
    a3 = jax.random.normal(k3, (2, 4, 16, 128), dtype=jnp.float32)
    out_aligned = jax.block_until_ready(cat_last_dim([a1, a2, a3]))
    ref_aligned = jnp.concatenate([a1, a2, a3], axis=-1)
    assert out_aligned.shape == (2, 4, 16, 512), out_aligned.shape
    assert jnp.array_equal(out_aligned, ref_aligned), "aligned path mismatch"

    # Narrow / unaligned widths: takes the XLA-concat fallback path.
    b1 = jax.random.normal(k4, (2, 4, 16, 16), dtype=jnp.float32)
    b2 = jax.random.normal(k5, (2, 4, 16, 8), dtype=jnp.float32)
    out_unaligned = jax.block_until_ready(cat_last_dim([b1, b2]))
    ref_unaligned = jnp.concatenate([b1, b2], axis=-1)
    assert out_unaligned.shape == (2, 4, 16, 24), out_unaligned.shape
    assert jnp.array_equal(out_unaligned, ref_unaligned), "fallback path mismatch"

    print("KERNEL_OK")
</pallas_src>

<mosaic_0001>
module attributes {stable_mosaic.version = 11 : i64} {
  func.func @_cat_kernel(%arg0: i32, %arg1: memref<128x128xf32, #tpu.memory_space<vmem>>, %arg2: memref<128x256xf32, #tpu.memory_space<vmem>>, %arg3: memref<128x128xf32, #tpu.memory_space<vmem>>, %arg4: memref<128x512xf32, #tpu.memory_space<vmem>>) attributes {dimension_semantics = [#tpu.dimension_semantics<parallel>], iteration_bounds = array<i64: 1>, scalar_prefetch = 0 : i64, scratch_operands = 0 : i64, tpu.core_type = #tpu.core_type<tc>, window_params = [{transform_indices = @transform_0, window_bounds = array<i64: 128, 128>}, {transform_indices = @transform_1, window_bounds = array<i64: 128, 256>}, {transform_indices = @transform_2, window_bounds = array<i64: 128, 128>}, {transform_indices = @transform_3, window_bounds = array<i64: 128, 512>}]} {
    %c0 = arith.constant 0 : index
    %c0_0 = arith.constant 0 : index
    %0 = vector.load %arg1[%c0, %c0_0] : memref<128x128xf32, #tpu.memory_space<vmem>>, vector<128x128xf32>
    %c0_1 = arith.constant 0 : index
    %c0_2 = arith.constant 0 : index
    %1 = vector.load %arg4[%c0_1, %c0_2] : memref<128x512xf32, #tpu.memory_space<vmem>>, vector<128x128xf32>
    tpu.vector_store %arg4[%c0_1, %c0_2], %0 {strides = array<i32>} : memref<128x512xf32, #tpu.memory_space<vmem>>, vector<128x128xf32>,
    %c0_3 = arith.constant 0 : index
    %c0_4 = arith.constant 0 : index
    %2 = vector.load %arg2[%c0_3, %c0_4] : memref<128x256xf32, #tpu.memory_space<vmem>>, vector<128x256xf32>
    %c0_5 = arith.constant 0 : index
    %c128 = arith.constant 128 : index
    %3 = vector.load %arg4[%c0_5, %c128] : memref<128x512xf32, #tpu.memory_space<vmem>>, vector<128x256xf32>
    tpu.vector_store %arg4[%c0_5, %c128], %2 {strides = array<i32>} : memref<128x512xf32, #tpu.memory_space<vmem>>, vector<128x256xf32>,
    %c0_6 = arith.constant 0 : index
    %c0_7 = arith.constant 0 : index
    %4 = vector.load %arg3[%c0_6, %c0_7] : memref<128x128xf32, #tpu.memory_space<vmem>>, vector<128x128xf32>
    %c0_8 = arith.constant 0 : index
    %c384 = arith.constant 384 : index
    %5 = vector.load %arg4[%c0_8, %c384] : memref<128x512xf32, #tpu.memory_space<vmem>>, vector<128x128xf32>
    tpu.vector_store %arg4[%c0_8, %c384], %4 {strides = array<i32>} : memref<128x512xf32, #tpu.memory_space<vmem>>, vector<128x128xf32>,
    return
  }
  func.func @transform_0(%arg0: i32) -> (i32, i32) {
    %c0_i32 = arith.constant 0 : i32
    %c0_i32_0 = arith.constant 0 : i32
    return %arg0, %c0_i32 : i32, i32
  }
  func.func @transform_1(%arg0: i32) -> (i32, i32) {
    %c0_i32 = arith.constant 0 : i32
    %c0_i32_0 = arith.constant 0 : i32
    return %arg0, %c0_i32 : i32, i32
  }
  func.func @transform_2(%arg0: i32) -> (i32, i32) {
    %c0_i32 = arith.constant 0 : i32
    %c0_i32_0 = arith.constant 0 : i32
    return %arg0, %c0_i32 : i32, i32
  }
  func.func @transform_3(%arg0: i32) -> (i32, i32) {
    %c0_i32 = arith.constant 0 : i32
    %c0_i32_0 = arith.constant 0 : i32
    return %arg0, %c0_i32 : i32, i32
  }
}

</mosaic_0001>

<llo_original>
// kernel: tpu_custom_call.1
$region0: #{tpu_custom_call.1}
  #allocation0 [shape = 'u32[]', space=smem, size = 0x4, offset = 0x4, fixed_abs, tag = 'smem constant byte address 0x4 - core index']
  #allocation1 [shape = 'u32[72,128]{1,0:T(1,128)}', space=vmem, size = 0x9000, scoped, tag = 'internal scratch']
  %s0 = inlined_call_operand.hbm [shape: f32[128,128], index: 0, kind: input, shape index: {}]
  %s1 = inlined_call_operand.hbm [shape: f32[128,256], index: 1, kind: input, shape index: {}]
  %s2 = inlined_call_operand.hbm [shape: f32[128,128], index: 2, kind: input, shape index: {}]
  %s3 = inlined_call_operand.hbm [shape: f32[128,512], index: 3, kind: output, shape index: {}]
  %s4 = sld [smem:[#allocation0]]
  $region34: #{tpu_custom_call.1} parent=0
    _
  %s6 = ssub.s32 1, %s4
  %s7 = scalar_select 0, %s6, %s4
  $region1: #{tpu_custom_call.1} parent=0
    #allocation2 [shape = 'u8[65536]{0}', space=vmem, size = 0x10000, scoped, tag = 'input window, operand 0, single buffered']
    #allocation3 [shape = 's32[1]{0}', space=sflag, size = 0x4, scoped, tag = 'scoped memory for tpu_custom_call.1']
    #allocation4 [shape = 's32[1]{0}', space=sflag, size = 0x4, scoped, tag = 'scoped memory for tpu_custom_call.1']
    #allocation5 [shape = 'u8[131072]{0}', space=vmem, size = 0x20000, scoped, tag = 'input window, operand 1, single buffered']
    #allocation6 [shape = 's32[1]{0}', space=sflag, size = 0x4, scoped, tag = 'scoped memory for tpu_custom_call.1']
    #allocation7 [shape = 'u8[65536]{0}', space=vmem, size = 0x10000, scoped, tag = 'input window, operand 2, single buffered']
    #allocation8 [shape = 'u8[262144]{0}', space=vmem, size = 0x40000, scoped, tag = 'output window, operand 0, single buffered']
    %8 = vsyncpa [#allocation3], 0
    %9 = vsyncpa [#allocation6], 0
    %10 = vsyncpa [#allocation4], 0
    // Predicated region
    $region2: #{tpu_custom_call.1} parent=1 // pred_check
      _
    $region3: #{tpu_custom_call.1} parent=1 // pred_check_branch
      %12 = sbr.rel (0) target = $region5
    $region4: #{tpu_custom_call.1} parent=1 // pred_region
      %14 = vsyncadd [#allocation3], 0
      %s15 = sshll.u32 %s0, 4
      %s16 = int_to_ptr.hbm [resolvable:$true] %s15
      %s17 = sshll.u32 [#allocation2], 4
      %s18 = int_to_ptr.vmem [resolvable:$true] %s17
      %23 = dma.hbm_to_vmem [thread:$0]  %s16, 2048, %s18, [#allocation3], 128, 128, 8
    $region5: #{tpu_custom_call.1} parent=1 // pred_fallthru
      _
    // Predicated region
    $region6: #{tpu_custom_call.1} parent=1 // pred_check
      _
    $region7: #{tpu_custom_call.1} parent=1 // pred_check_branch
      %25 = sbr.rel (0) target = $region9
    $region8: #{tpu_custom_call.1} parent=1 // pred_region
      %27 = vsyncadd [#allocation6], 0
      %s28 = sshll.u32 %s1, 4
      %s29 = int_to_ptr.hbm [resolvable:$true] %s28
      %s30 = sshll.u32 [#allocation5], 4
      %s31 = int_to_ptr.vmem [resolvable:$true] %s30
      %36 = dma.hbm_to_vmem [thread:$0]  %s29, 4096, %s31, [#allocation6], 256, 256, 16
    $region9: #{tpu_custom_call.1} parent=1 // pred_fallthru
      _
    // Predicated region
    $region10: #{tpu_custom_call.1} parent=1 // pred_check
      _
    $region11: #{tpu_custom_call.1} parent=1 // pred_check_branch
      %38 = sbr.rel (0) target = $region13
    $region12: #{tpu_custom_call.1} parent=1 // pred_region
      %40 = vsyncadd [#allocation6], 0
      %s41 = sshll.u32 %s2, 4
      %s42 = int_to_ptr.hbm [resolvable:$true] %s41
      %s43 = sshll.u32 [#allocation7], 4
      %s44 = int_to_ptr.vmem [resolvable:$true] %s43
      %49 = dma.hbm_to_vmem [thread:$0]  %s42, 2048, %s44, [#allocation6], 128, 128, 8
    $region13: #{tpu_custom_call.1} parent=1 // pred_fallthru
      _
    // Predicated region
    $region14: #{tpu_custom_call.1} parent=1 // pred_check
      _
    $region15: #{tpu_custom_call.1} parent=1 // pred_check_branch
      %51 = sbr.rel (0) target = $region17
    $region16: #{tpu_custom_call.1} parent=1 // pred_region
      %53 = dma.done [#allocation3], 2048
    $region17: #{tpu_custom_call.1} parent=1 // pred_fallthru
      _
    // Predicated region
    $region18: #{tpu_custom_call.1} parent=1 // pred_check
      _
    $region19: #{tpu_custom_call.1} parent=1 // pred_check_branch
      %55 = sbr.rel (0) target = $region21
    $region20: #{tpu_custom_call.1} parent=1 // pred_region
      %57 = dma.done [#allocation6], 4096
    $region21: #{tpu_custom_call.1} parent=1 // pred_fallthru
      _
    // Predicated region
    $region22: #{tpu_custom_call.1} parent=1 // pred_check
      _
    $region23: #{tpu_custom_call.1} parent=1 // pred_check_branch
      %59 = sbr.rel (0) target = $region25
    $region24: #{tpu_custom_call.1} parent=1 // pred_region
      %61 = dma.done [#allocation6], 2048
    $region25: #{tpu_custom_call.1} parent=1 // pred_fallthru
      _
    %v62 = vld [vmem:[#allocation2] sm:$0xff]
    %v63 = vld [vmem:[#allocation2 + $0x8] sm:$0xff]
    %v64 = vld [vmem:[#allocation2 + $0x10] sm:$0xff]
    %v65 = vld [vmem:[#allocation2 + $0x18] sm:$0xff]
    %v66 = vld [vmem:[#allocation2 + $0x20] sm:$0xff]
    %v67 = vld [vmem:[#allocation2 + $0x28] sm:$0xff]
    %v68 = vld [vmem:[#allocation2 + $0x30] sm:$0xff]
    %v69 = vld [vmem:[#allocation2 + $0x38] sm:$0xff]
    %v70 = vld [vmem:[#allocation2 + $0x40] sm:$0xff]
    %v71 = vld [vmem:[#allocation2 + $0x48] sm:$0xff]
    %v72 = vld [vmem:[#allocation2 + $0x50] sm:$0xff]
    %v73 = vld [vmem:[#allocation2 + $0x58] sm:$0xff]
    %v74 = vld [vmem:[#allocation2 + $0x60] sm:$0xff]
    %v75 = vld [vmem:[#allocation2 + $0x68] sm:$0xff]
    %v76 = vld [vmem:[#allocation2 + $0x70] sm:$0xff]
    %v77 = vld [vmem:[#allocation2 + $0x78] sm:$0xff]
    %78 = vst [vmem:[#allocation8] sm:$0xff] %v62
    %79 = vst [vmem:[#allocation8 + $0x20] sm:$0xff] %v63
    %80 = vst [vmem:[#allocation8 + $0x40] sm:$0xff] %v64
    %81 = vst [vmem:[#allocation8 + $0x60] sm:$0xff] %v65
    %82 = vst [vmem:[#allocation8 + $0x80] sm:$0xff] %v66
    %83 = vst [vmem:[#allocation8 + $0xa0] sm:$0xff] %v67
    %84 = vst [vmem:[#allocation8 + $0xc0] sm:$0xff] %v68
    %85 = vst [vmem:[#allocation8 + $0xe0] sm:$0xff] %v69
    %86 = vst [vmem:[#allocation8 + $0x100] sm:$0xff] %v70
    %87 = vst [vmem:[#allocation8 + $0x120] sm:$0xff] %v71
    %88 = vst [vmem:[#allocation8 + $0x140] sm:$0xff] %v72
    %89 = vst [vmem:[#allocation8 + $0x160] sm:$0xff] %v73
    %90 = vst [vmem:[#allocation8 + $0x180] sm:$0xff] %v74
    %91 = vst [vmem:[#allocation8 + $0x1a0] sm:$0xff] %v75
    %92 = vst [vmem:[#allocation8 + $0x1c0] sm:$0xff] %v76
    %93 = vst [vmem:[#allocation8 + $0x1e0] sm:$0xff] %v77
    %v94 = vld [vmem:[#allocation5] sm:$0xff]
    %v95 = vld [vmem:[#allocation5 + $0x8] sm:$0xff]
    %v96 = vld [vmem:[#allocation5 + $0x10] sm:$0xff]
    %v97 = vld [vmem:[#allocation5 + $0x18] sm:$0xff]
    %v98 = vld [vmem:[#allocation5 + $0x20] sm:$0xff]
    %v99 = vld [vmem:[#allocation5 + $0x28] sm:$0xff]
    %v100 = vld [vmem:[#allocation5 + $0x30] sm:$0xff]
    %v101 = vld [vmem:[#allocation5 + $0x38] sm:$0xff]
    %v102 = vld [vmem:[#allocation5 + $0x40] sm:$0xff]
    %v103 = vld [vmem:[#allocation5 + $0x48] sm:$0xff]
    %v104 = vld [vmem:[#allocation5 + $0x50] sm:$0xff]
    %v105 = vld [vmem:[#allocation5 + $0x58] sm:$0xff]
    %v106 = vld [vmem:[#allocation5 + $0x60] sm:$0xff]
    %v107 = vld [vmem:[#allocation5 + $0x68] sm:$0xff]
    %v108 = vld [vmem:[#allocation5 + $0x70] sm:$0xff]
    %v109 = vld [vmem:[#allocation5 + $0x78] sm:$0xff]
    %v110 = vld [vmem:[#allocation5 + $0x80] sm:$0xff]
    %v111 = vld [vmem:[#allocation5 + $0x88] sm:$0xff]
    %v112 = vld [vmem:[#allocation5 + $0x90] sm:$0xff]
    %v113 = vld [vmem:[#allocation5 + $0x98] sm:$0xff]
    %v114 = vld [vmem:[#allocation5 + $0xa0] sm:$0xff]
    %v115 = vld [vmem:[#allocation5 + $0xa8] sm:$0xff]
    %v116 = vld [vmem:[#allocation5 + $0xb0] sm:$0xff]
    %v117 = vld [vmem:[#allocation5 + $0xb8] sm:$0xff]
    %v118 = vld [vmem:[#allocation5 + $0xc0] sm:$0xff]
    %v119 = vld [vmem:[#allocation5 + $0xc8] sm:$0xff]
    %v120 = vld [vmem:[#allocation5 + $0xd0] sm:$0xff]
    %v121 = vld [vmem:[#allocation5 + $0xd8] sm:$0xff]
    %v122 = vld [vmem:[#allocation5 + $0xe0] sm:$0xff]
    %v123 = vld [vmem:[#allocation5 + $0xe8] sm:$0xff]
    %v124 = vld [vmem:[#allocation5 + $0xf0] sm:$0xff]
    %v125 = vld [vmem:[#allocation5 + $0xf8] sm:$0xff]
    %126 = vst [vmem:[#allocation8 + $0x8] sm:$0xff] %v94
    %127 = vst [vmem:[#allocation8 + $0x10] sm:$0xff] %v95
    %128 = vst [vmem:[#allocation8 + $0x28] sm:$0xff] %v96
    %129 = vst [vmem:[#allocation8 + $0x30] sm:$0xff] %v97
    %130 = vst [vmem:[#allocation8 + $0x48] sm:$0xff] %v98
    %131 = vst [vmem:[#allocation8 + $0x50] sm:$0xff] %v99
    %132 = vst [vmem:[#allocation8 + $0x68] sm:$0xff] %v100
    %133 = vst [vmem:[#allocation8 + $0x70] sm:$0xff] %v101
    %134 = vst [vmem:[#allocation8 + $0x88] sm:$0xff] %v102
    %135 = vst [vmem:[#allocation8 + $0x90] sm:$0xff] %v103
    %136 = vst [vmem:[#allocation8 + $0xa8] sm:$0xff] %v104
    %137 = vst [vmem:[#allocation8 + $0xb0] sm:$0xff] %v105
    %138 = vst [vmem:[#allocation8 + $0xc8] sm:$0xff] %v106
    %139 = vst [vmem:[#allocation8 + $0xd0] sm:$0xff] %v107
    %140 = vst [vmem:[#allocation8 + $0xe8] sm:$0xff] %v108
    %141 = vst [vmem:[#allocation8 + $0xf0] sm:$0xff] %v109
    %142 = vst [vmem:[#allocation8 + $0x108] sm:$0xff] %v110
    %143 = vst [vmem:[#allocation8 + $0x110] sm:$0xff] %v111
    %144 = vst [vmem:[#allocation8 + $0x128] sm:$0xff] %v112
    %145 = vst [vmem:[#allocation8 + $0x130] sm:$0xff] %v113
    %146 = vst [vmem:[#allocation8 + $0x148] sm:$0xff] %v114
    %147 = vst [vmem:[#allocation8 + $0x150] sm:$0xff] %v115
    %148 = vst [vmem:[#allocation8 + $0x168] sm:$0xff] %v116
    %149 = vst [vmem:[#allocation8 + $0x170] sm:$0xff] %v117
    %150 = vst [vmem:[#allocation8 + $0x188] sm:$0xff] %v118
    %151 = vst [vmem:[#allocation8 + $0x190] sm:$0xff] %v119
    %152 = vst [vmem:[#allocation8 + $0x1a8] sm:$0xff] %v120
    %153 = vst [vmem:[#allocation8 + $0x1b0] sm:$0xff] %v121
    %154 = vst [vmem:[#allocation8 + $0x1c8] sm:$0xff] %v122
    %155 = vst [vmem:[#allocation8 + $0x1d0] sm:$0xff] %v123
    %156 = vst [vmem:[#allocation8 + $0x1e8] sm:$0xff] %v124
    %157 = vst [vmem:[#allocation8 + $0x1f0] sm:$0xff] %v125
    %v158 = vld [vmem:[#allocation7] sm:$0xff]
    %v159 = vld [vmem:[#allocation7 + $0x8] sm:$0xff]
    %v160 = vld [vmem:[#allocation7 + $0x10] sm:$0xff]
    %v161 = vld [vmem:[#allocation7 + $0x18] sm:$0xff]
    %v162 = vld [vmem:[#allocation7 + $0x20] sm:$0xff]
    %v163 = vld [vmem:[#allocation7 + $0x28] sm:$0xff]
    %v164 = vld [vmem:[#allocation7 + $0x30] sm:$0xff]
    %v165 = vld [vmem:[#allocation7 + $0x38] sm:$0xff]
    %v166 = vld [vmem:[#allocation7 + $0x40] sm:$0xff]
    %v167 = vld [vmem:[#allocation7 + $0x48] sm:$0xff]
    %v168 = vld [vmem:[#allocation7 + $0x50] sm:$0xff]
    %v169 = vld [vmem:[#allocation7 + $0x58] sm:$0xff]
    %v170 = vld [vmem:[#allocation7 + $0x60] sm:$0xff]
    %v171 = vld [vmem:[#allocation7 + $0x68] sm:$0xff]
    %v172 = vld [vmem:[#allocation7 + $0x70] sm:$0xff]
    %v173 = vld [vmem:[#allocation7 + $0x78] sm:$0xff]
    %174 = vst [vmem:[#allocation8 + $0x18] sm:$0xff] %v158
    %175 = vst [vmem:[#allocation8 + $0x38] sm:$0xff] %v159
    %176 = vst [vmem:[#allocation8 + $0x58] sm:$0xff] %v160
    %177 = vst [vmem:[#allocation8 + $0x78] sm:$0xff] %v161
    %178 = vst [vmem:[#allocation8 + $0x98] sm:$0xff] %v162
    %179 = vst [vmem:[#allocation8 + $0xb8] sm:$0xff] %v163
    %180 = vst [vmem:[#allocation8 + $0xd8] sm:$0xff] %v164
    %181 = vst [vmem:[#allocation8 + $0xf8] sm:$0xff] %v165
    %182 = vst [vmem:[#allocation8 + $0x118] sm:$0xff] %v166
    %183 = vst [vmem:[#allocation8 + $0x138] sm:$0xff] %v167
    %184 = vst [vmem:[#allocation8 + $0x158] sm:$0xff] %v168
    %185 = vst [vmem:[#allocation8 + $0x178] sm:$0xff] %v169
    %186 = vst [vmem:[#allocation8 + $0x198] sm:$0xff] %v170
    %187 = vst [vmem:[#allocation8 + $0x1b8] sm:$0xff] %v171
    %188 = vst [vmem:[#allocation8 + $0x1d8] sm:$0xff] %v172
    %189 = vst [vmem:[#allocation8 + $0x1f8] sm:$0xff] %v173
    // Predicated region
    $region26: #{tpu_custom_call.1} parent=1 // pred_check
      _
    $region27: #{tpu_custom_call.1} parent=1 // pred_check_branch
      %191 = sbr.rel (0) target = $region29
    $region28: #{tpu_custom_call.1} parent=1 // pred_region
      %193 = vsyncadd [#allocation4], 0
      %s194 = sshll.u32 [#allocation8], 4
      %s195 = int_to_ptr.vmem [resolvable:$true] %s194
      %s196 = sshll.u32 %s3, 4
      %s197 = int_to_ptr.hbm [resolvable:$true] %s196
      %202 = dma.vmem_to_hbm [thread:$0]  %s195, 8192, %s197, [#allocation4], 512, 512, 32
    $region29: #{tpu_custom_call.1} parent=1 // pred_fallthru
      _
    // Predicated region
    $region30: #{tpu_custom_call.1} parent=1 // pred_check
      _
    $region31: #{tpu_custom_call.1} parent=1 // pred_check_branch
      %204 = sbr.rel (0) target = $region33
    $region32: #{tpu_custom_call.1} parent=1 // pred_region
      %206 = dma.done [#allocation4], 8192
    $region33: #{tpu_custom_call.1} parent=1 // pred_fallthru
      _
    %207 = vsyncpa [#allocation3], 1
    %208 = vsyncpa [#allocation6], 1
    %209 = vsyncpa [#allocation4], 1

</llo_original>
